<compile_context>
chip_gen: v7x
topology: tpu7x:2x2x1
jax: 0.10.0
libtpu: 0.0.40
codegen_flags: <defaults>
</compile_context>

<pallas_src>
import numpy as np
import jax
import jax.numpy as jnp
from jax.experimental import pallas as pl
from jax.experimental.pallas import tpu as pltpu


# ---------------------------------------------------------------------------
# helpers / deterministic parameter construction (mirrors init_kernels)
# ---------------------------------------------------------------------------
def _round_up(x, m):
    return ((x + m - 1) // m) * m


def _hamming_periodic(win_len):
    # scipy.signal.get_window('hamming', win_len, fftbins=True)
    n = np.arange(win_len)
    return 0.54 - 0.46 * np.cos(2.0 * np.pi * n / win_len)


def init_kernels_np(win_len, fft_len, win_type="hamming", invers=False):
    if win_type is None or win_type == "None":
        window = np.ones(win_len)
    else:
        window = _hamming_periodic(win_len)
    N = fft_len
    fourier_basis = np.fft.rfft(np.eye(N))[:win_len]          # [win_len, N//2+1] complex
    real_kernel = np.real(fourier_basis)
    imag_kernel = np.imag(fourier_basis)
    kernel = np.concatenate([real_kernel, imag_kernel], 1).T  # [N+2, win_len]
    if invers:
        kernel = np.linalg.pinv(kernel).T                     # [N+2, win_len]
    kernel = kernel * window
    kernel = kernel[:, None, :]                               # [N+2, 1, win_len]
    return kernel.astype(np.float32), window[None, :, None].astype(np.float32)


# ---------------------------------------------------------------------------
# Pallas kernel: frame matmul + single-RMW overlap-add into resident accumulator
# ---------------------------------------------------------------------------
def _make_istft_kernel(tb, tb_halo, r, stride_pad):
    """tb: frames per block (mult of 16), tb_halo: rows touched per step (mult of 8),
    r: overlap factor, stride_pad: lane-dense chunk width (mult of 128)."""
    pad_rows = tb_halo - tb          # >= r - 1, multiple of 8

    def kernel(x_ref, w_ref, o_ref):
        # x_ref : [tb, C_pad]               spectra of tb consecutive frames (one batch)
        # w_ref : [C_pad, r*stride_pad]     zero-padded f32 synthesis weight
        # o_ref : [t_chunks_out, stride_pad] per-batch output accumulator (VMEM resident)
        i = pl.program_id(1)

        @pl.when(i == 0)
        def _init():
            o_ref[...] = jnp.zeros_like(o_ref)

        # One MXU matmul per frame block; activations upcast, weight kept in f32.
        x = x_ref[...].astype(jnp.float32)
        frames = jnp.dot(x, w_ref[...],
                         preferred_element_type=jnp.float32)   # [tb, r*stride_pad]

        # Combine the r overlapping chunks in-register: chunk j of frame t lands in
        # output chunk (t + j) -> shift chunk j down by j rows (XLU roll) and add.
        if pad_rows:
            tail = jnp.zeros((pad_rows, stride_pad), jnp.float32)
            local = jnp.concatenate([frames[:, :stride_pad], tail], axis=0)
        else:
            local = frames[:, :stride_pad]
        for j in range(1, r):
            chunk = frames[:, j * stride_pad:(j + 1) * stride_pad]
            ext = jnp.concatenate([chunk, tail], axis=0) if pad_rows else chunk
            local = local + pltpu.roll(ext, shift=j, axis=0)

        # Single aligned read-modify-write of the resident accumulator per grid step.
        base = pl.multiple_of(i * tb, 8)
        o_ref[pl.ds(base, tb_halo), :] += local

    return kernel


# ---------------------------------------------------------------------------
# Module wrapper
# ---------------------------------------------------------------------------
class ConviSTFTPallas:
    def __init__(self, win_len, win_inc, fft_len=None, win_type="hamming",
                 feature_type="real", block_frames=512, compute_dtype=jnp.float32):
        if fft_len is None:
            self.fft_len = int(2 ** np.ceil(np.log2(win_len)))
        else:
            self.fft_len = fft_len
        kernel, window = init_kernels_np(win_len, self.fft_len, win_type, invers=True)
        self.weight = kernel                       # [C, 1, win_len]  (f32, kept f32)
        self.window = window                       # [1, win_len, 1]
        self.feature_type = feature_type
        self.win_type = win_type
        self.win_len = win_len
        self.stride = win_inc
        self.dim = self.fft_len
        # v6e (128 MiB VMEM): sweep 512-1024; v7x (64 MiB): ~256.
        self.block_frames = block_frames
        self.compute_dtype = compute_dtype

        self.C = self.fft_len + 2
        self.r = -(-win_len // win_inc)                    # overlap factor ceil(win/hop)
        self.stride_pad = _round_up(win_inc, 128)          # lane-dense chunk width
        # bf16 packs 16 rows per sublane vreg -> round K to 16; never pad K to 128.
        k_align = 16 if jnp.dtype(compute_dtype).itemsize == 2 else 8
        self.C_pad = _round_up(self.C, k_align)

        # Zero-padded synthesis weight: one lane-dense slab of width stride_pad per chunk.
        w_pad = np.zeros((self.C_pad, self.r * self.stride_pad), dtype=np.float32)
        for j in range(self.r):
            lo = j * win_inc
            hi = min(win_len, lo + win_inc)
            w_pad[:self.C, j * self.stride_pad:j * self.stride_pad + (hi - lo)] = \
                kernel[:, 0, lo:hi]
        self._w_host = w_pad
        self._w_dev = None
        self._fwd_cache = {}    # (B, T, dtype name) -> (jitted fwd, w_dev, inv_dev)

    # -- cached constants ---------------------------------------------------
    def _weight_dev(self):
        if self._w_dev is None:
            self._w_dev = jnp.asarray(self._w_host)   # weight stays f32 for fidelity
        return self._w_dev

    def _inv_coff_host(self, T):
        """1/(window-energy overlap-add + 1e-8) over the untrimmed length L."""
        L = (T - 1) * self.stride + self.win_len
        w2 = self.window[0, :, 0].astype(np.float64) ** 2
        coff = np.zeros(L, dtype=np.float64)
        for t in range(T):
            coff[t * self.stride:t * self.stride + self.win_len] += w2
        inv = 1.0 / (coff + 1e-8)
        return inv.astype(np.float32), L

    # -- forward builder (cached per shape/dtype) ----------------------------
    def _get_forward(self, B, T):
        key = (B, T, jnp.dtype(self.compute_dtype).name)
        if key in self._fwd_cache:
            return self._fwd_cache[key]

        stride, win_len, r = self.stride, self.win_len, self.r
        C, C_pad, stride_pad = self.C, self.C_pad, self.stride_pad
        x_dtype = self.compute_dtype

        tb = _round_up(min(self.block_frames, T), 16)
        T_pad = _round_up(T, tb)
        n_blk = T_pad // tb
        tb_halo = _round_up(tb + r - 1, 8)          # rows touched per grid step
        t_chunks_out = (n_blk - 1) * tb + tb_halo   # covers T_pad + r - 1 chunks

        inv_host, L = self._inv_coff_host(T)
        inv_dev = jnp.asarray(inv_host)
        w_dev = self._weight_dev()
        a = max(win_len - stride, 0)
        # NOTE: when win_len == stride the torch reference `[..., a:-a]` returns an
        # empty tensor; we return the full (untrimmed) signal instead.

        # VMEM budget (review: bound it explicitly for v7x 64 MiB / v5e 16 MiB defaults).
        x_bytes = jnp.dtype(x_dtype).itemsize
        xb = tb * C_pad * x_bytes
        wb = C_pad * r * stride_pad * 4
        ob = t_chunks_out * stride_pad * 4
        frames_b = tb * r * stride_pad * 4
        local_b = tb_halo * stride_pad * 4
        vmem_est = 2 * xb + 2 * wb + 2 * ob + frames_b + local_b + (2 << 20)
        vmem_limit = int(min(64 << 20, max(32 << 20, vmem_est)))

        cost = pl.CostEstimate(
            flops=int(2 * B * T_pad * C_pad * r * stride_pad),
            transcendentals=0,
            bytes_accessed=int(B * T_pad * C_pad * x_bytes + wb
                               + B * t_chunks_out * stride_pad * 4),
        )

        kern = _make_istft_kernel(tb, tb_halo, r, stride_pad)
        call = pl.pallas_call(
            kern,
            out_shape=jax.ShapeDtypeStruct((B * t_chunks_out, stride_pad), jnp.float32),
            grid=(B, n_blk),
            in_specs=[
                pl.BlockSpec((tb, C_pad), lambda b, i: (b * n_blk + i, 0)),
                pl.BlockSpec((C_pad, r * stride_pad), lambda b, i: (0, 0)),
            ],
            out_specs=pl.BlockSpec((t_chunks_out, stride_pad), lambda b, i: (b, 0)),
            compiler_params=pltpu.CompilerParams(
                dimension_semantics=("parallel", "arbitrary"),
                vmem_limit_bytes=vmem_limit),
            cost_estimate=cost,
        )
        # TODO(synk): split the frame axis across both v7x TensorCores when B == 1.

        @jax.jit
        def fwd(inputs, w, inv):
            # TODO(synk): consume inputs in native [B, C, T] layout (TN dot_general /
            # transposed-frames accumulation) to drop this transpose+pad copy of the
            # spectrogram; kept as thin XLA glue here for lowering safety.
            x = jnp.transpose(inputs, (0, 2, 1))                       # [B, T, C]
            x = jnp.pad(x, ((0, 0), (0, T_pad - T), (0, C_pad - C)))
            x = x.reshape(B * T_pad, C_pad).astype(x_dtype)
            out = call(x, w)                                           # [B*t_chunks_out, stride_pad]
            # Lane-padding slice + window-energy normalize + edge trim: one fused pass.
            out = out.reshape(B, t_chunks_out, stride_pad)[:, :, :stride]
            out = out.reshape(B, t_chunks_out * stride)[:, :L] * inv
            if a > 0:
                out = out[:, a:L - a]
            return out[:, None, :]                                     # [B, 1, L-2a]

        entry = (fwd, w_dev, inv_dev)
        self._fwd_cache[key] = entry
        return entry

    def __call__(self, inputs, phase=None):
        if phase is not None:
            real = inputs * jnp.cos(phase)
            imag = inputs * jnp.sin(phase)
            inputs = jnp.concatenate([real, imag], axis=1)
        inputs = jnp.asarray(inputs)
        B, C, T = inputs.shape
        if C != self.C:
            raise ValueError(f"expected {self.C} channels, got {C}")
        fwd, w_dev, inv_dev = self._get_forward(int(B), int(T))
        return fwd(inputs, w_dev, inv_dev)


# ---------------------------------------------------------------------------
# NumPy reference (explicit overlap-add, mirrors torch conv_transpose1d path)
# ---------------------------------------------------------------------------
def _ref_forward(x, weight, window, win_len, stride):
    B, C, T = x.shape
    L = (T - 1) * stride + win_len
    out = np.zeros((B, 1, L), dtype=np.float64)
    for b in range(B):
        for t in range(T):
            frame = x[b, :, t] @ weight[:, 0, :].astype(np.float64)
            out[b, 0, t * stride:t * stride + win_len] += frame
    coff = np.zeros((1, 1, L), dtype=np.float64)
    wsq = window[0, :, 0].astype(np.float64) ** 2
    for t in range(T):
        coff[0, 0, t * stride:t * stride + win_len] += wsq
    out = out / (coff + 1e-8)
    a = win_len - stride
    if a > 0:
        return out[..., a:L - a]
    return out


if __name__ == "__main__":
    key = jax.random.PRNGKey(0)

    def run_case(win_len, win_inc, fft_len, B, T, block_frames, compute_dtype, tol):
        C = fft_len + 2
        k = jax.random.fold_in(key, win_len * 1000 + fft_len)
        inputs = jax.random.normal(k, (B, C, T), dtype=jnp.float32)
        model = ConviSTFTPallas(win_len, win_inc, fft_len, win_type="hamming",
                                feature_type="real", block_frames=block_frames,
                                compute_dtype=compute_dtype)
        out = jax.block_until_ready(model(inputs))
        ref = _ref_forward(np.asarray(inputs, dtype=np.float64),
                           model.weight, model.window, win_len, win_inc)
        assert out.shape == ref.shape, (out.shape, ref.shape)
        np.testing.assert_allclose(np.asarray(out, dtype=np.float64), ref,
                                   rtol=tol, atol=tol)

    # f32 path, 2 frame blocks per batch -> exercises resident-accumulator init/accum.
    run_case(16, 8, 16, B=2, T=32, block_frames=16,
             compute_dtype=jnp.float32, tol=1e-4)
    # r = 3 with a partial last chunk (win_len not a multiple of the hop).
    run_case(20, 8, 32, B=2, T=32, block_frames=16,
             compute_dtype=jnp.float32, tol=1e-4)
    # bf16 activations (halved HBM input stream); weight + accumulation stay f32.
    run_case(16, 8, 16, B=2, T=32, block_frames=16,
             compute_dtype=jnp.bfloat16, tol=2e-2)

    print("KERNEL_OK")
</pallas_src>

<mosaic_0001>
module attributes {stable_mosaic.version = 11 : i64} {
  func.func @kernel(%arg0: i32, %arg1: i32, %arg2: memref<16x24xf32, #tpu.memory_space<vmem>>, %arg3: memref<24x256xf32, #tpu.memory_space<vmem>>, %arg4: memref<40x128xf32, #tpu.memory_space<vmem>>) attributes {dimension_semantics = [#tpu.dimension_semantics<parallel>, #tpu.dimension_semantics<arbitrary>], iteration_bounds = array<i64: 2, 2>, scalar_prefetch = 0 : i64, scratch_operands = 0 : i64, tpu.core_type = #tpu.core_type<tc>, window_params = [{transform_indices = @transform_0, window_bounds = array<i64: 16, 24>}, {pipeline_mode = #tpu.pipeline_mode<synchronous>, transform_indices = @transform_1, window_bounds = array<i64: 24, 256>}, {transform_indices = @transform_2, window_bounds = array<i64: 40, 128>}]} {
    %c0_i32 = arith.constant 0 : i32
    %0 = arith.cmpi eq, %arg1, %c0_i32 : i32
    %1 = arith.extui %0 : i1 to i32
    %c0_i32_0 = arith.constant 0 : i32
    %2 = arith.cmpi ne, %1, %c0_i32_0 : i32
    scf.if %2 {
      %cst_7 = arith.constant 0.000000e+00 : f32
      %20 = vector.broadcast %cst_7 : f32 to vector<40x128xf32>
      %c0_8 = arith.constant 0 : index
      %c0_9 = arith.constant 0 : index
      %21 = vector.load %arg4[%c0_8, %c0_9] : memref<40x128xf32, #tpu.memory_space<vmem>>, vector<40x128xf32>
      tpu.vector_store %arg4[%c0_8, %c0_9], %20 {strides = array<i32>} : memref<40x128xf32, #tpu.memory_space<vmem>>, vector<40x128xf32>,
    } else {
    }
    %c0 = arith.constant 0 : index
    %c0_1 = arith.constant 0 : index
    %3 = vector.load %arg2[%c0, %c0_1] : memref<16x24xf32, #tpu.memory_space<vmem>>, vector<16x24xf32>
    %c0_2 = arith.constant 0 : index
    %c0_3 = arith.constant 0 : index
    %4 = vector.load %arg3[%c0_2, %c0_3] : memref<24x256xf32, #tpu.memory_space<vmem>>, vector<24x256xf32>
    %cst = arith.constant dense<0.000000e+00> : vector<16x256xf32>
    %5 = tpu.matmul %3, %4, %cst {dimension_numbers = #tpu.dot_dimension_numbers<[1], [0], [0], [1], [0, 0, 1, 1], [], []>} : vector<16x24xf32>, vector<24x256xf32>, vector<16x256xf32> -> vector<16x256xf32>
    %cst_4 = arith.constant 0.000000e+00 : f32
    %6 = vector.broadcast %cst_4 : f32 to vector<8x128xf32>
    %7 = vector.extract_strided_slice %5 {offsets = [0, 0], sizes = [16, 128], strides = [1, 1]} : vector<16x256xf32> to vector<16x128xf32>
    %8 = tpu.concatenate %7, %6 in 0 : vector<16x128xf32>, vector<8x128xf32> -> vector<24x128xf32>
    %9 = vector.extract_strided_slice %5 {offsets = [0, 128], sizes = [16, 128], strides = [1, 1]} : vector<16x256xf32> to vector<16x128xf32>
    %10 = tpu.concatenate %9, %6 in 0 : vector<16x128xf32>, vector<8x128xf32> -> vector<24x128xf32>
    %c1_i32 = arith.constant 1 : i32
    %11 = tpu.dynamic_rotate %10 by %c1_i32 dim 0 : vector<24x128xf32>, i32 -> vector<24x128xf32>
    %12 = arith.addf %8, %11 : vector<24x128xf32>
    %c16_i32 = arith.constant 16 : i32
    %13 = arith.muli %arg1, %c16_i32 : i32
    %14 = tpu.assume_multiple %13, 8 : i32
    %15 = arith.index_cast %14 : i32 to index
    %c0_5 = arith.constant 0 : index
    %16 = vector.load %arg4[%15, %c0_5] : memref<40x128xf32, #tpu.memory_space<vmem>>, vector<24x128xf32>
    %17 = arith.addf %16, %12 : vector<24x128xf32>
    %18 = arith.index_cast %14 : i32 to index
    %c0_6 = arith.constant 0 : index
    %19 = vector.load %arg4[%18, %c0_6] : memref<40x128xf32, #tpu.memory_space<vmem>>, vector<24x128xf32>
    tpu.vector_store %arg4[%18, %c0_6], %17 {strides = array<i32>} : memref<40x128xf32, #tpu.memory_space<vmem>>, vector<24x128xf32>,
    return
  }
  func.func @transform_0(%arg0: i32, %arg1: i32) -> (i32, i32) {
    %c2_i32 = arith.constant 2 : i32
    %0 = arith.muli %arg0, %c2_i32 : i32
    %1 = arith.addi %0, %arg1 : i32
    %c0_i32 = arith.constant 0 : i32
    %c0_i32_0 = arith.constant 0 : i32
    return %1, %c0_i32 : i32, i32
  }
  func.func @transform_1(%arg0: i32, %arg1: i32) -> (i32, i32) {
    %c0_i32 = arith.constant 0 : i32
    %c0_i32_0 = arith.constant 0 : i32
    %c0_i32_1 = arith.constant 0 : i32
    return %c0_i32, %c0_i32_0 : i32, i32
  }
  func.func @transform_2(%arg0: i32, %arg1: i32) -> (i32, i32) {
    %c0_i32 = arith.constant 0 : i32
    %c0_i32_0 = arith.constant 0 : i32
    return %arg0, %c0_i32 : i32, i32
  }
}

</mosaic_0001>

<llo_original>
// kernel: fwd.1
$region0: #{fwd.1}
  #allocation0 [shape = 'u32[]', space=smem, size = 0x4, offset = 0x4, fixed_abs, tag = 'smem constant byte address 0x4 - core index']
  #allocation1 [shape = 'u32[144,128]{1,0:T(1,128)}', space=vmem, size = 0x12000, scoped, tag = 'internal scratch']
  %s0 = inlined_call_operand.vmem [shape: f32[64,24], index: 0, kind: input, shape index: {}]
  %s1 = inlined_call_operand.vmem [shape: f32[24,256], index: 1, kind: input, shape index: {}]
  %s2 = inlined_call_operand.vmem [shape: f32[80,128], index: 2, kind: output, shape index: {}]
  %s3 = sld [smem:[#allocation0]]
  $region45: #{fwd.1} parent=0
    _
  %s5 = ssub.s32 1, %s3
  %s6 = scalar_select 0, %s5, %s3
  loop: start=0, step=1, limit=6
  $region2: #{fwd.1} parent=0 // loop_pre_header
    _
  $region3: #{fwd.1} parent=0 // loop_header
    %s8 = sphi 0, %s12
    %p9 = scmp.ge.s32.totalorder %s8, 6
    %s15 = sphi 0, %s27
    %s16 = sphi 0, %s23
    %s17 = sphi 0, %s15
    %s18 = sphi 0, %s16
    %s19 = sphi 0, %s17
    %s20 = sphi 0, %s18
    %s34 = sphi 0, %s36
    %s37 = sphi 0, %s34
    %s38 = sphi 0, %s37
    %s54 = sphi 0, %s38
    %s58 = sphi 0, %s58
    %s60 = sphi 0, %s58
    %s61 = sphi 0, %s60
    %s75 = sphi 0, %s61
    %s81 = sphi 0, %s83
    %s84 = sphi 0, %s81
    %s85 = sphi 0, %s84
    %s101 = sphi 0, %s85
  $region4: #{fwd.1} parent=0 // loop_header_branch
    %11 = sbr.rel (%p9) target = $region8
  $region5: #{fwd.1} parent=0 // loop_body
    %s13 = ssub.s32 %s8, 1
    %s14 = ssub.s32 %s8, 2
    %s21 = sadd.s32 1, %s16
    %p22 = scmp.ge.s32.totalorder %s21, 2
    %s23 = scalar_select %p22, 0, %s21
    %s24 = sadd.s32 1, %s15
    %s25 = scalar_select %p22, %s24, %s15
    %p26 = scmp.ge.s32.totalorder %s25, 2
    %s27 = scalar_select %p26, 0, %s25
    %s28 = smul.u32 %s15, 2
    %s29 = sadd.s32 %s28, %s16
    %s30 = smul.u32 %s27, 2
    %s31 = sadd.s32 %s30, %s23
    %s32 = ssub.s32 %s29, %s31
    %p33 = scmp.eq.s32.totalorder %s32, 0
    %s35 = sadd.s32 %s34, 1
    %s36 = scalar_select %p33, %s34, %s35
    %p39 = pneg %p33
    %p40 = scmp.eq.s32.totalorder %s8, 3
    %p41 = por %p39, %p40
    %p42 = scmp.ne.s32.totalorder %s34, %s37
    %p43 = scmp.eq.s32.totalorder %s8, 0
    %p44 = por %p42, %p43
    %p45 = scmp.ne.s32.totalorder %s34, %s37
    %p46 = scmp.eq.s32.totalorder %s13, 3
    %p47 = por %p45, %p46
    %p48 = scmp.ne.s32.totalorder %s37, %s38
    %p49 = scmp.eq.s32.totalorder %s13, 0
    %p50 = por %p48, %p49
    %p51 = scmp.ne.s32.totalorder %s37, %s38
    %p52 = scmp.eq.s32.totalorder %s14, 3
    %p53 = por %p51, %p52
    %p55 = scmp.ne.s32.totalorder %s38, %s54
    %p56 = scmp.eq.s32.totalorder %s14, 0
    %p57 = por %p55, %p56
    %s59 = sadd.s32 %s58, 1
    %p62 = scmp.eq.s32.totalorder %s8, 3
    %p63 = scmp.ne.s32.totalorder %s58, %s60
    %p64 = scmp.eq.s32.totalorder %s8, 0
    %p65 = por %p63, %p64
    %p66 = scmp.ne.s32.totalorder %s58, %s60
    %p67 = scmp.eq.s32.totalorder %s13, 3
    %p68 = por %p66, %p67
    %p69 = scmp.ne.s32.totalorder %s60, %s61
    %p70 = scmp.eq.s32.totalorder %s13, 0
    %p71 = por %p69, %p70
    %p72 = scmp.ne.s32.totalorder %s60, %s61
    %p73 = scmp.eq.s32.totalorder %s14, 3
    %p74 = por %p72, %p73
    %p76 = scmp.ne.s32.totalorder %s61, %s75
    %p77 = scmp.eq.s32.totalorder %s14, 0
    %p78 = por %p76, %p77
    %s79 = ssub.s32 %s15, %s27
    %p80 = scmp.eq.s32.totalorder %s79, 0
    %s82 = sadd.s32 %s81, 1
    %s83 = scalar_select %p80, %s81, %s82
    %p86 = pneg %p80
    %p87 = scmp.eq.s32.totalorder %s8, 3
    %p88 = por %p86, %p87
    %p89 = scmp.ne.s32.totalorder %s81, %s84
    %p90 = scmp.eq.s32.totalorder %s8, 0
    %p91 = por %p89, %p90
    %p92 = scmp.ne.s32.totalorder %s81, %s84
    %p93 = scmp.eq.s32.totalorder %s13, 3
    %p94 = por %p92, %p93
    %p95 = scmp.ne.s32.totalorder %s84, %s85
    %p96 = scmp.eq.s32.totalorder %s13, 0
    %p97 = por %p95, %p96
    %p98 = scmp.ne.s32.totalorder %s84, %s85
    %p99 = scmp.eq.s32.totalorder %s14, 3
    %p100 = por %p98, %p99
    %p102 = scmp.ne.s32.totalorder %s85, %s101
    %p103 = scmp.eq.s32.totalorder %s14, 0
    %p104 = por %p102, %p103
    %p105 = scmp.le.s32.totalorder 1, %s8
    %p106 = scmp.lt.s32.totalorder %s8, 5
    %p107 = pnand %p105, %p106
    %p108 = pneg %p107
    // Predicated region
    $region9: #{fwd.1} parent=5 // pred_check
      _
    $region10: #{fwd.1} parent=5 // pred_check_branch
      %110 = sbr.rel (%p107) target = $region12
    $region11: #{fwd.1} parent=5 // pred_region
      %s111 = ssub.s32 %s8, 1
      // Predicated region
      $region13: #{fwd.1} parent=11 // pred_check
        %p112 = pneg %p71
      $region14: #{fwd.1} parent=11 // pred_check_branch
        %114 = sbr.rel (%p112) target = $region16
      $region15: #{fwd.1} parent=11 // pred_region
        _
      $region16: #{fwd.1} parent=11 // pred_fallthru
        _
    $region12: #{fwd.1} parent=5 // pred_fallthru
      _
    %p115 = scmp.lt.s32.totalorder %s8, 4
    // Predicated region
    $region17: #{fwd.1} parent=5 // pred_check
      %p116 = pneg %p115
    $region18: #{fwd.1} parent=5 // pred_check_branch
      %118 = sbr.rel (%p116) target = $region20
    $region19: #{fwd.1} parent=5 // pred_region
      // Predicated region
      $region21: #{fwd.1} parent=19 // pred_check
        %p119 = pneg %p44
      $region22: #{fwd.1} parent=19 // pred_check_branch
        %121 = sbr.rel (%p119) target = $region24
      $region23: #{fwd.1} parent=19 // pred_region
        %s122 = smul.u32 %s15, 2
        %s123 = sadd.s32 %s122, %s16
        %s124 = smul.u32 2, %s123
        %p125 = scmp.lt.s32.totalorder %s124, 7
        %s126 = scalar_select %p125, %s124, 7
        %s127 = smul.addr %s126, 8
        %s128 = scalar_lea.vmem %s0, %s127
        %s129 = smul.u32 %s15, 2
        %s130 = sadd.s32 %s129, %s16
        %s131 = smul.u32 2, %s130
      $region24: #{fwd.1} parent=19 // pred_fallthru
        _
    $region20: #{fwd.1} parent=5 // pred_fallthru
      _
    %p132 = scmp.le.s32.totalorder 1, %s8
    %p133 = scmp.lt.s32.totalorder %s8, 5
    %p134 = pnand %p132, %p133
    %p135 = pneg %p134
    // Predicated region
    $region25: #{fwd.1} parent=5 // pred_check
      _
    $region26: #{fwd.1} parent=5 // pred_check_branch
      %137 = sbr.rel (%p134) target = $region28
    $region27: #{fwd.1} parent=5 // pred_region
      %s138 = ssub.s32 %s8, 1
      %s139 = smul.u32 %s17, 2
      %s140 = sadd.s32 %s139, %s18
      %s141 = smul.u32 2, %s140
      %p142 = scmp.lt.s32.totalorder %s141, 7
      %s143 = scalar_select %p142, %s141, 7
      %s144 = smul.addr %s143, 8
      %s145 = scalar_lea.vmem %s0, %s144
      %p146 = pneg %p50
      %p147 = pneg %p47
      %p148 = pneg %p71
      %p149 = pneg %p68
      %p150 = pneg %p97
      %p151 = pneg %p94
      %s152 = smul.u32 5, %s17
      %p153 = scmp.lt.s32.totalorder %s152, 9
      %s154 = scalar_select %p153, %s152, 9
      %s155 = smul.addr %s154, 8
      %s156 = scalar_lea.vmem %s2, %s155
      %s157 = smul.u32 %s17, 2
      %s158 = sadd.s32 %s157, %s18
      %s159 = smul.u32 2, %s158
      %p160 = scmp.lt.s32.totalorder %s159, 7
      %s161 = scalar_select %p160, %s159, 7
      %s162 = smul.addr %s161, 8
      %s163 = scalar_lea.vmem %s0, %s162
      %s164 = smul.u32 %s17, 2
      %s165 = sadd.s32 %s164, %s18
      %s166 = smul.u32 2, %s165
      %s167 = smul.u32 5, %s17
      %p168 = scmp.lt.s32.totalorder %s167, 9
      %s169 = scalar_select %p168, %s167, 9
      %s170 = smul.addr %s169, 8
      %s171 = scalar_lea.vmem %s2, %s170
      %s172 = smul.u32 5, %s17
      %p173 = scmp.eq.s32.totalorder %s18, 0
      // Predicated region
      $region29: #{fwd.1} parent=27 // pred_check
        %p174 = pneg %p173
      $region30: #{fwd.1} parent=27 // pred_check_branch
        %176 = sbr.rel (%p174) target = $region32
      $region31: #{fwd.1} parent=27 // pred_region
        %177 = vst [vmem:[%s171] sm:$0xff] 0.0
        %178 = vst [vmem:[%s171 + $0x8] sm:$0xff] 0.0
        %179 = vst [vmem:[%s171 + $0x10] sm:$0xff] 0.0
        %180 = vst [vmem:[%s171 + $0x18] sm:$0xff] 0.0
        %181 = vst [vmem:[%s171 + $0x20] sm:$0xff] 0.0
      $region32: #{fwd.1} parent=27 // pred_fallthru
        _
      %v182 = vld [vmem:[%s163] sm:$0xff]
      %v183 = vld [vmem:[%s163 + $0x8] sm:$0xff]
      %v184 = vld [vmem:[%s1] sm:$0xff]
      %v185 = vld [vmem:[%s1 + $0x8] sm:$0xff]
      %v186 = vld [vmem:[%s1 + $0x10] sm:$0xff]
      %v187 = vld [vmem:[%s1 + $0x18] sm:$0xff]
      %v188 = vld [vmem:[%s1 + $0x20] sm:$0xff]
      %v189 = vld [vmem:[%s1 + $0x28] sm:$0xff]
      %vm190 = vcmask 195584
      %v192 = vsel %vm190, %v182, 0
      %v195 = vsel %vm190, %v183, 0
      %197 = vmatprep.subr.mxu0 %v185
      %198 = vmatpush1.msra.mxu0 %v184
      %199 = vmatprep.subr.mxu0 %v187
      %200 = vmatpush1.msra.mxu0 %v186
      %201 = vmatprep.subr.mxu0 %v189
      %202 = vmatpush1.msra.mxu0 %v188
      %203 = vmatprep.subr.mxu0 0.0
      %204 = vmatpush1.msra.mxu0 0.0
      %205 = vmatprep.subr.mxu0 0.0
      %206 = vmatpush1.msra.mxu0 0.0
      %207 = vmatprep.subr.mxu0 0.0
      %208 = vmatpush1.msra.mxu0 0.0
      %209 = vmatprep.subr.mxu0 0.0
      %210 = vmatpush1.msra.mxu0 0.0
      %211 = vmatprep.subr.mxu0 0.0
      %212 = vmatpush1.msra.mxu0 0.0
      %213 = vmatprep.subr.mxu0 0.0
      %214 = vmatpush1.msra.mxu0 0.0
      %215 = vmatprep.subr.mxu0 0.0
      %216 = vmatpush1.msra.mxu0 0.0
      %217 = vmatprep.subr.mxu0 0.0
      %218 = vmatpush1.msra.mxu0 0.0
      %219 = vmatprep.subr.mxu0 0.0
      %220 = vmatpush1.msra.mxu0 0.0
      %221 = vmatprep.subr.mxu0 0.0
      %222 = vmatpush1.msra.mxu0 0.0
      %223 = vmatprep.subr.mxu0 0.0
      %224 = vmatpush1.msra.mxu0 0.0
      %225 = vmatprep.subr.mxu0 0.0
      %226 = vmatpush1.msra.mxu0 0.0
      %227 = vmatprep.subr.mxu0 0.0
      %228 = vmatpush1.msra.mxu0 0.0
      %229 = vmatprep.subr.mxu0 0.0
      %230 = vmatpush1.msra.mxu0 0.0
      %231 = vmatprep.subr.mxu0 0.0
      %232 = vmatpush1.msra.mxu0 0.0
      %233 = vmatprep.subr.mxu0 0.0
      %234 = vmatpush1.msra.mxu0 0.0
      %235 = vmatprep.subr.mxu0 0.0
      %236 = vmatpush1.msra.mxu0 0.0
      %237 = vmatprep.subr.mxu0 0.0
      %238 = vmatpush1.msra.mxu0 0.0
      %239 = vmatprep.subr.mxu0 0.0
      %240 = vmatpush1.msra.mxu0 0.0
      %241 = vmatprep.subr.mxu0 0.0
      %242 = vmatpush1.msra.mxu0 0.0
      %243 = vmatprep.subr.mxu0 0.0
      %244 = vmatpush1.msra.mxu0 0.0
      %245 = vmatprep.subr.mxu0 0.0
      %246 = vmatpush1.msra.mxu0 0.0
      %247 = vmatprep.subr.mxu0 0.0
      %248 = vmatpush1.msra.mxu0 0.0
      %249 = vmatprep.subr.mxu0 0.0
      %250 = vmatpush1.msra.mxu0 0.0
      %251 = vmatprep.subr.mxu0 0.0
      %252 = vmatpush1.msra.mxu0 0.0
      %253 = vmatprep.subr.mxu0 0.0
      %254 = vmatpush1.msra.mxu0 0.0
      %255 = vmatprep.subr.mxu0 0.0
      %256 = vmatpush1.msra.mxu0 0.0
      %257 = vmatprep.subr.mxu0 0.0
      %258 = vmatpush1.msra.mxu0 0.0
      %259 = vmatprep.subr.mxu0 0.0
      %260 = vmatpush1.msra.mxu0 0.0
      %261 = vmatprep.mubr.f32.mxu0 0.0
      %262 = vmatmul.mubr.f32.gmra.mrb[0].mxu0 %v192
      %v263 = vpop.f32.mrb[0].mxu0
      %v264 = vadd.f32 0.0, %v263
      %v265 = vpop.f32.mrb[0].mxu0
      %v266 = vadd.f32 0.0, %v265
      %267 = vmatprep.mubr.f32.mxu0 0.0
      %268 = vmatmul.mubr.f32.gmra.mrb[0].mxu0 %v195
      %v269 = vpop.f32.mrb[0].mxu0
      %v270 = vadd.f32 0.0, %v269
      %v271 = vpop.f32.mrb[0].mxu0
      %v272 = vadd.f32 0.0, %v271
      %273 = vdwg.mxu0
      %v274 = vrot.slane %v266, 7
      %v275 = vrot.slane %v272, 7
      %v276 = vlaneseq
      %v277 = vshrl.u32 %v276, 7
      %vm278 = vcmp.lt.s32.totalorder %v277, 1
      %v279 = vsel %vm278, %v275, 0.0
      %v280 = vsel %vm278, %v274, %v275
      %v281 = vsel %vm278, 0.0, %v274
      %v282 = vadd.f32 %v264, %v281
      %v283 = vadd.f32 %v270, %v280
      %v284 = vadd.f32 %v279, 0.0
      %s285 = smul.u32 %s18, 16
      %s286 = scalar_lea.vmem %s171, %s285
      %v287 = vld [vmem:[%s286] sm:$0xff]
      %v288 = vld [vmem:[%s286 + $0x8] sm:$0xff]
      %v289 = vld [vmem:[%s286 + $0x10] sm:$0xff]
      %v290 = vadd.f32 %v287, %v282
      %v291 = vadd.f32 %v288, %v283
      %v292 = vadd.f32 %v289, %v284
      %293 = vst [vmem:[%s286] sm:$0xff] %v290
      %294 = vst [vmem:[%s286 + $0x8] sm:$0xff] %v291
      %295 = vst [vmem:[%s286 + $0x10] sm:$0xff] %v292
      %s296 = smul.u32 5, %s17
      %p297 = scmp.lt.s32.totalorder %s296, 9
      %s298 = scalar_select %p297, %s296, 9
      %s299 = smul.addr %s298, 8
      %s300 = scalar_lea.vmem %s2, %s299
      // Predicated region
      $region33: #{fwd.1} parent=27 // pred_check
        %p301 = pneg %p94
      $region34: #{fwd.1} parent=27 // pred_check_branch
        %303 = sbr.rel (%p301) target = $region36
      $region35: #{fwd.1} parent=27 // pred_region
        %s304 = smul.u32 5, %s17
      $region36: #{fwd.1} parent=27 // pred_fallthru
        _
    $region28: #{fwd.1} parent=5 // pred_fallthru
      _
    %p305 = scmp.le.s32.totalorder 2, %s8
    // Predicated region
    $region37: #{fwd.1} parent=5 // pred_check
      %p306 = pneg %p305
    $region38: #{fwd.1} parent=5 // pred_check_branch
      %308 = sbr.rel (%p306) target = $region40
    $region39: #{fwd.1} parent=5 // pred_region
      %s309 = ssub.s32 %s8, 2
      // Predicated region
      $region41: #{fwd.1} parent=39 // pred_check
        %p310 = pneg %p100
      $region42: #{fwd.1} parent=39 // pred_check_branch
        %312 = sbr.rel (%p310) target = $region44
      $region43: #{fwd.1} parent=39 // pred_region
        %s313 = smul.u32 5, %s19
        %p314 = scmp.lt.s32.totalorder %s313, 9
        %s315 = scalar_select %p314, %s313, 9
        %s316 = smul.addr %s315, 8
        %s317 = scalar_lea.vmem %s2, %s316
      $region44: #{fwd.1} parent=39 // pred_fallthru
        _
    $region40: #{fwd.1} parent=5 // pred_fallthru
      _
  $region6: #{fwd.1} parent=0 // loop_footer
    %s12 = sadd.s32 1, %s8
  $region7: #{fwd.1} parent=0 // loop_footer_branch
    %7 = sbr.rel target = $region3
  $region8: #{fwd.1} parent=0 // loop_exit
    _

</llo_original>
